<compile_context>
chip_gen: v6e
topology: v6e:2x2x1
jax: 0.10.0
libtpu: 0.0.40
codegen_flags: <defaults>
</compile_context>

<pallas_src>
import functools

import jax
import jax.numpy as jnp
from jax.experimental import pallas as pl
from jax.experimental.pallas import tpu as pltpu

_MIB = 1024 * 1024


def _round_up(a: int, b: int) -> int:
    return (a + b - 1) // b * b


@functools.lru_cache(maxsize=1)
def _tpu_vmem_capacity_bytes() -> int:
    try:
        info = pltpu.get_tpu_info()
        cap = getattr(info, "vmem_capacity_bytes", None)
        if cap:
            return int(cap)
    except Exception:
        pass
    return 128 * _MIB


def _pick_tk(hidden_pad: int, target: int) -> int:
    """Largest multiple of 128 that divides hidden_pad and is <= target."""
    n128 = hidden_pad // 128
    tk = 128
    for d in range(1, n128 + 1):
        if n128 % d == 0 and d * 128 <= target:
            tk = d * 128
    return tk


def _select_tuning(n: int, hidden_pad: int):
    cap = _tpu_vmem_capacity_bytes()
    if cap <= 64 * _MIB:           # v7x-class TensorCore: 64 MiB VMEM
        tk_target = 512 if n >= 2048 else 1024
        vmem_limit = 48 * _MIB
    else:                          # v5e / v6e: 128 MiB VMEM
        tk_target = 1024 if n >= 2048 else 2048
        vmem_limit = 100 * _MIB
    return _pick_tk(hidden_pad, tk_target), vmem_limit


def mlp_kernel(x_hbm, w1_ref, gamma_ref, beta_ref, w2_ref, b2_ref, o_ref,
               acc_ref, h_ref, x_vmem, copy_sem):
    """Skewed fused Linear -> BN -> ReLU -> Linear forward.

    Step k: L1 matmul of hidden tile k -> skew buffer slot k%2, while
    BN+ReLU+L2 consume tile k-1 from the other slot.  Step num_k flushes
    the last tile and writes the output.
    """
    k = pl.program_id(0)
    last = pl.num_programs(0) - 1        # = num_k

    def linear1_into(slot):
        # MXU: (N, in_pad) @ (in_pad, tk) -> f32 (bias-1 dropped: cancelled by BN).
        h_ref[slot] = jnp.dot(x_vmem[...], w1_ref[...],
                              preferred_element_type=jnp.float32)

    def bn_relu_linear2(slot):
        # Two-pass (centered-variance) training-mode BatchNorm over the full
        # batch, ReLU, then MXU: (N, tk) @ (tk, proj_pad) accumulated in f32.
        h = h_ref[slot]
        inv_n = 1.0 / h.shape[0]
        mean = jnp.sum(h, axis=0, keepdims=True) * inv_n
        d = h - mean
        var = jnp.sum(d * d, axis=0, keepdims=True) * inv_n
        hn = d * jax.lax.rsqrt(var + 1e-5)
        hn = hn * gamma_ref[...] + beta_ref[...]
        hn = jnp.maximum(hn, 0.0)
        acc_ref[...] += jnp.dot(hn.astype(jnp.bfloat16), w2_ref[...],
                                preferred_element_type=jnp.float32)

    @pl.when(k == 0)
    def _first():
        # Single-buffered resident copy of x (BlockSpec would double-buffer it).
        cp = pltpu.make_async_copy(x_hbm, x_vmem, copy_sem)
        cp.start()
        cp.wait()
        # Fold the Linear-2 bias into the accumulator init.
        acc_ref[...] = jnp.broadcast_to(b2_ref[...], acc_ref.shape)
        linear1_into(0)

    @pl.when(jnp.logical_and(k > 0, k < last))
    def _steady():
        # Read old slot first, then fill the other: MXU(L1 of tile k) can
        # overlap the VPU/XLU BN pass of tile k-1.
        bn_relu_linear2(jax.lax.rem(k - 1, 2))
        linear1_into(jax.lax.rem(k, 2))

    @pl.when(k == last)
    def _flush():
        bn_relu_linear2(jax.lax.rem(k - 1, 2))
        o_ref[...] = acc_ref[...].astype(o_ref.dtype)


def prepare_params(w1, b1, gamma, beta, w2, b2):
    """Pad + cast parameters ONCE (stored format).  w1:(in,hidden) w2:(hidden,proj).

    b1 is intentionally dropped: a per-feature constant added before
    training-mode BatchNorm is exactly cancelled by the mean subtraction.
    """
    del b1
    in_dim, hidden = w1.shape
    proj = w2.shape[1]
    in_pad = _round_up(in_dim, 128)
    hidden_pad = _round_up(hidden, 128)
    proj_pad = _round_up(proj, 128)

    w1_p = jnp.zeros((in_pad, hidden_pad), jnp.bfloat16).at[:in_dim, :hidden].set(
        w1.astype(jnp.bfloat16))
    w2_p = jnp.zeros((hidden_pad, proj_pad), jnp.bfloat16).at[:hidden, :proj].set(
        w2.astype(jnp.bfloat16))
    g_p = jnp.ones((1, hidden_pad), jnp.float32).at[:, :hidden].set(
        jnp.reshape(gamma, (1, -1)).astype(jnp.float32))
    be_p = jnp.zeros((1, hidden_pad), jnp.float32).at[:, :hidden].set(
        jnp.reshape(beta, (1, -1)).astype(jnp.float32))
    b2_p = jnp.zeros((1, proj_pad), jnp.float32).at[:, :proj].set(
        jnp.reshape(b2, (1, -1)).astype(jnp.float32))

    return {"w1": w1_p, "gamma": g_p, "beta": be_p, "w2": w2_p, "b2": b2_p,
            "proj_dim": proj}


@functools.partial(jax.jit, static_argnames=("proj_dim",))
def _mlp_forward_impl(x, w1_p, g_p, be_p, w2_p, b2_p, *, proj_dim):
    n, in_dim = x.shape
    in_pad, hidden_pad = w1_p.shape
    proj_pad = w2_p.shape[1]
    tk, vmem_limit = _select_tuning(n, hidden_pad)
    num_k = hidden_pad // tk
    out_dtype = x.dtype

    # x: cast to bf16 for the MXU; pad the feature dim only when needed.
    # NOTE: bf16 L1 operands mean batch statistics differ slightly from an
    # f32 PyTorch reference — a conscious precision/throughput trade-off.
    if in_dim == in_pad:
        x_p = x.astype(jnp.bfloat16)
    else:
        x_p = jnp.zeros((n, in_pad), jnp.bfloat16).at[:, :in_dim].set(
            x.astype(jnp.bfloat16))

    grid_spec = pltpu.PrefetchScalarGridSpec(
        num_scalar_prefetch=0,
        grid=(num_k + 1,),                                     # +1 flush step
        in_specs=[
            pl.BlockSpec(memory_space=pl.ANY),                 # x: manual single-copy DMA
            pl.BlockSpec((in_pad, tk),
                         lambda k: (0, jnp.minimum(k, num_k - 1))),   # w1 tile k
            pl.BlockSpec((1, tk),
                         lambda k: (0, jnp.maximum(k - 1, 0))),       # gamma tile k-1
            pl.BlockSpec((1, tk),
                         lambda k: (0, jnp.maximum(k - 1, 0))),       # beta tile k-1
            pl.BlockSpec((tk, proj_pad),
                         lambda k: (jnp.maximum(k - 1, 0), 0)),       # w2 tile k-1
            pl.BlockSpec((1, proj_pad), lambda k: (0, 0)),            # b2 (tiny)
        ],
        out_specs=pl.BlockSpec((n, proj_pad), lambda k: (0, 0)),      # resident across k
        scratch_shapes=[
            pltpu.VMEM((n, proj_pad), jnp.float32),     # f32 accumulator (+ b2 folded in)
            pltpu.VMEM((2, n, tk), jnp.float32),        # skewed-pipeline h double buffer
            pltpu.VMEM((n, in_pad), jnp.bfloat16),      # single resident copy of x
            pltpu.SemaphoreType.DMA,                    # x copy semaphore
        ],
    )

    out = pl.pallas_call(
        mlp_kernel,
        out_shape=jax.ShapeDtypeStruct((n, proj_pad), out_dtype),
        grid_spec=grid_spec,
        compiler_params=pltpu.CompilerParams(
            dimension_semantics=("arbitrary",),          # accumulator lives across k
            vmem_limit_bytes=vmem_limit,
        ),
    )(x_p, w1_p, g_p, be_p, w2_p, b2_p)

    return out[:, :proj_dim]


def mlp_forward(x, params):
    return _mlp_forward_impl(x, params["w1"], params["gamma"], params["beta"],
                             params["w2"], params["b2"],
                             proj_dim=params["proj_dim"])


def init_params(key, input_dim, hidden_dim, proj_dim):
    """PyTorch nn.Linear-default init: uniform(-1/sqrt(fan_in), 1/sqrt(fan_in)).
    Weights stored transposed to (in, out)."""
    k1, k2, k3, k4 = jax.random.split(key, 4)
    bound1 = 1.0 / jnp.sqrt(jnp.float32(input_dim))
    bound2 = 1.0 / jnp.sqrt(jnp.float32(hidden_dim))
    w1 = jax.random.uniform(k1, (input_dim, hidden_dim), jnp.float32, -bound1, bound1)
    b1 = jax.random.uniform(k2, (1, hidden_dim), jnp.float32, -bound1, bound1)
    w2 = jax.random.uniform(k3, (hidden_dim, proj_dim), jnp.float32, -bound2, bound2)
    b2 = jax.random.uniform(k4, (1, proj_dim), jnp.float32, -bound2, bound2)
    gamma = jnp.ones((1, hidden_dim), jnp.float32)   # BatchNorm1d defaults
    beta = jnp.zeros((1, hidden_dim), jnp.float32)
    return w1, b1, gamma, beta, w2, b2


def reference_forward(x, w1, b1, gamma, beta, w2, b2):
    """Pure-JAX f32 reference matching the PyTorch module (training-mode BN)."""
    h = x @ w1 + b1
    mean = jnp.mean(h, axis=0, keepdims=True)
    var = jnp.mean((h - mean) ** 2, axis=0, keepdims=True)   # biased variance
    h = (h - mean) / jnp.sqrt(var + 1e-5)
    h = h * gamma + beta
    h = jnp.maximum(h, 0.0)
    return h @ w2 + b2


if __name__ == "__main__":
    # Small shapes consistent with the module: batch=8, inputDim=32,
    # hiddenDim=64 (stand-in for 4096), projectionDim=16.
    N, INPUT_DIM, HIDDEN_DIM, PROJ_DIM = 8, 32, 64, 16

    key = jax.random.PRNGKey(0)
    kx, kp = jax.random.split(key)
    x = jax.random.normal(kx, (N, INPUT_DIM), jnp.float32)
    w1, b1, gamma, beta, w2, b2 = init_params(kp, INPUT_DIM, HIDDEN_DIM, PROJ_DIM)

    params = prepare_params(w1, b1, gamma, beta, w2, b2)   # one-time pad + bf16 cast
    out = mlp_forward(x, params)
    out = jax.block_until_ready(out)

    ref = reference_forward(x, w1, b1, gamma, beta, w2, b2)
    assert out.shape == (N, PROJ_DIM), out.shape
    # bf16 MXU operands (f32 accumulation) -> loosened tolerance vs f32 reference.
    assert jnp.allclose(out, ref.astype(out.dtype), atol=5e-2, rtol=5e-2), (
        float(jnp.max(jnp.abs(out - ref))))

    print("KERNEL_OK")
</pallas_src>

<mosaic_0001>
module attributes {stable_mosaic.version = 11 : i64} {
  func.func @mlp_kernel(%arg0: i32, %arg1: memref<8x128xbf16, #tpu.memory_space<any>>, %arg2: memref<128x128xbf16, #tpu.memory_space<vmem>>, %arg3: memref<1x128xf32, #tpu.memory_space<vmem>>, %arg4: memref<1x128xf32, #tpu.memory_space<vmem>>, %arg5: memref<128x128xbf16, #tpu.memory_space<vmem>>, %arg6: memref<1x128xf32, #tpu.memory_space<vmem>>, %arg7: memref<8x128xf32, #tpu.memory_space<vmem>>, %arg8: memref<8x128xf32, #tpu.memory_space<vmem>>, %arg9: memref<2x8x128xf32, #tpu.memory_space<vmem>>, %arg10: memref<8x128xbf16, #tpu.memory_space<vmem>>, %arg11: memref<!tpu.dma_semaphore, #tpu.memory_space<semaphore_mem>>) attributes {dimension_semantics = [#tpu.dimension_semantics<arbitrary>], iteration_bounds = array<i64: 2>, scalar_prefetch = 0 : i64, scratch_operands = 4 : i64, tpu.core_type = #tpu.core_type<tc>, window_params = [{}, {transform_indices = @transform_1, window_bounds = array<i64: 128, 128>}, {transform_indices = @transform_2, window_bounds = array<i64: 1, 128>}, {transform_indices = @transform_3, window_bounds = array<i64: 1, 128>}, {transform_indices = @transform_4, window_bounds = array<i64: 128, 128>}, {pipeline_mode = #tpu.pipeline_mode<synchronous>, transform_indices = @transform_5, window_bounds = array<i64: 1, 128>}, {pipeline_mode = #tpu.pipeline_mode<synchronous>, transform_indices = @transform_6, window_bounds = array<i64: 8, 128>}]} {
    %c0_i32 = arith.constant 0 : i32
    %0 = arith.cmpi eq, %arg0, %c0_i32 : i32
    %1 = arith.extui %0 : i1 to i32
    %c0_i32_0 = arith.constant 0 : i32
    %2 = arith.cmpi ne, %1, %c0_i32_0 : i32
    scf.if %2 {
      tpu.enqueue_dma source(%arg1 : memref<8x128xbf16, #tpu.memory_space<any>>) target(%arg10 : memref<8x128xbf16, #tpu.memory_space<vmem>>) target_semaphore(%arg11 : memref<!tpu.dma_semaphore, #tpu.memory_space<semaphore_mem>>)
      tpu.wait_dma2 semaphore(%arg11 : memref<!tpu.dma_semaphore, #tpu.memory_space<semaphore_mem>>) src(%arg1 : memref<8x128xbf16, #tpu.memory_space<any>>) dst(%arg10 : memref<8x128xbf16, #tpu.memory_space<vmem>>)
      %c0 = arith.constant 0 : index
      %c0_5 = arith.constant 0 : index
      %11 = vector.load %arg6[%c0, %c0_5] : memref<1x128xf32, #tpu.memory_space<vmem>>, vector<1x128xf32>
      %12 = vector.shape_cast %11 : vector<1x128xf32> to vector<1x128xf32>
      %13 = vector.broadcast %12 : vector<1x128xf32> to vector<8x128xf32>
      %c0_6 = arith.constant 0 : index
      %c0_7 = arith.constant 0 : index
      %14 = vector.load %arg8[%c0_6, %c0_7] : memref<8x128xf32, #tpu.memory_space<vmem>>, vector<8x128xf32>
      tpu.vector_store %arg8[%c0_6, %c0_7], %13 {strides = array<i32>} : memref<8x128xf32, #tpu.memory_space<vmem>>, vector<8x128xf32>,
      %c0_8 = arith.constant 0 : index
      %c0_9 = arith.constant 0 : index
      %15 = vector.load %arg10[%c0_8, %c0_9] : memref<8x128xbf16, #tpu.memory_space<vmem>>, vector<8x128xbf16>
      %c0_10 = arith.constant 0 : index
      %c0_11 = arith.constant 0 : index
      %16 = vector.load %arg2[%c0_10, %c0_11] : memref<128x128xbf16, #tpu.memory_space<vmem>>, vector<128x128xbf16>
      %cst = arith.constant dense<0.000000e+00> : vector<8x128xf32>
      %17 = tpu.matmul %15, %16, %cst {dimension_numbers = #tpu.dot_dimension_numbers<[1], [0], [0], [1], [0, 0, 1, 1], [], []>} : vector<8x128xbf16>, vector<128x128xbf16>, vector<8x128xf32> -> vector<8x128xf32>
      %c0_12 = arith.constant 0 : index
      %c0_13 = arith.constant 0 : index
      %c0_14 = arith.constant 0 : index
      %18 = vector.load %arg9[%c0_12, %c0_13, %c0_14] : memref<2x8x128xf32, #tpu.memory_space<vmem>>, vector<1x8x128xf32>
      %19 = vector.shape_cast %18 : vector<1x8x128xf32> to vector<8x128xf32>
      %20 = vector.shape_cast %17 : vector<8x128xf32> to vector<1x8x128xf32>
      tpu.vector_store %arg9[%c0_12, %c0_13, %c0_14], %20 {strides = array<i32>} : memref<2x8x128xf32, #tpu.memory_space<vmem>>, vector<1x8x128xf32>,
    } else {
    }
    %c0_i32_1 = arith.constant 0 : i32
    %3 = arith.cmpi sgt, %arg0, %c0_i32_1 : i32
    %c1_i32 = arith.constant 1 : i32
    %4 = arith.cmpi slt, %arg0, %c1_i32 : i32
    %5 = arith.andi %3, %4 : i1
    %6 = arith.extui %5 : i1 to i32
    %c0_i32_2 = arith.constant 0 : i32
    %7 = arith.cmpi ne, %6, %c0_i32_2 : i32
    scf.if %7 {
      %c1_i32_5 = arith.constant 1 : i32
      %11 = arith.subi %arg0, %c1_i32_5 : i32
      %c2_i32 = arith.constant 2 : i32
      %12 = arith.remsi %11, %c2_i32 : i32
      %13 = arith.index_cast %12 : i32 to index
      %c0 = arith.constant 0 : index
      %c0_6 = arith.constant 0 : index
      %14 = vector.load %arg9[%13, %c0, %c0_6] : memref<2x8x128xf32, #tpu.memory_space<vmem>>, vector<1x8x128xf32>
      %15 = vector.shape_cast %14 : vector<1x8x128xf32> to vector<8x128xf32>
      %cst = arith.constant dense<0.000000e+00> : vector<128xf32>
      %16 = vector.multi_reduction <add>, %15, %cst [0] : vector<8x128xf32> to vector<128xf32>
      %17 = vector.shape_cast %16 : vector<128xf32> to vector<1x128xf32>
      %cst_7 = arith.constant 1.250000e-01 : f32
      %18 = vector.broadcast %cst_7 : f32 to vector<1x128xf32>
      %19 = arith.mulf %17, %18 : vector<1x128xf32>
      %20 = vector.broadcast %19 : vector<1x128xf32> to vector<8x128xf32>
      %21 = arith.subf %15, %20 : vector<8x128xf32>
      %22 = arith.mulf %21, %21 : vector<8x128xf32>
      %cst_8 = arith.constant dense<0.000000e+00> : vector<128xf32>
      %23 = vector.multi_reduction <add>, %22, %cst_8 [0] : vector<8x128xf32> to vector<128xf32>
      %24 = vector.shape_cast %23 : vector<128xf32> to vector<1x128xf32>
      %cst_9 = arith.constant 1.250000e-01 : f32
      %25 = vector.broadcast %cst_9 : f32 to vector<1x128xf32>
      %26 = arith.mulf %24, %25 : vector<1x128xf32>
      %cst_10 = arith.constant 9.99999974E-6 : f32
      %27 = vector.broadcast %cst_10 : f32 to vector<1x128xf32>
      %28 = arith.addf %26, %27 : vector<1x128xf32>
      %29 = math.rsqrt %28 : vector<1x128xf32>
      %30 = vector.broadcast %29 : vector<1x128xf32> to vector<8x128xf32>
      %31 = arith.mulf %21, %30 : vector<8x128xf32>
      %c0_11 = arith.constant 0 : index
      %c0_12 = arith.constant 0 : index
      %32 = vector.load %arg3[%c0_11, %c0_12] : memref<1x128xf32, #tpu.memory_space<vmem>>, vector<1x128xf32>
      %33 = vector.broadcast %32 : vector<1x128xf32> to vector<8x128xf32>
      %34 = arith.mulf %31, %33 : vector<8x128xf32>
      %c0_13 = arith.constant 0 : index
      %c0_14 = arith.constant 0 : index
      %35 = vector.load %arg4[%c0_13, %c0_14] : memref<1x128xf32, #tpu.memory_space<vmem>>, vector<1x128xf32>
      %36 = vector.broadcast %35 : vector<1x128xf32> to vector<8x128xf32>
      %37 = arith.addf %34, %36 : vector<8x128xf32>
      %cst_15 = arith.constant 0.000000e+00 : f32
      %38 = vector.broadcast %cst_15 : f32 to vector<8x128xf32>
      %39 = arith.maximumf %37, %38 : vector<8x128xf32>
      %c0_16 = arith.constant 0 : index
      %c0_17 = arith.constant 0 : index
      %40 = vector.load %arg8[%c0_16, %c0_17] : memref<8x128xf32, #tpu.memory_space<vmem>>, vector<8x128xf32>
      %41 = arith.truncf %39 : vector<8x128xf32> to vector<8x128xbf16>
      %c0_18 = arith.constant 0 : index
      %c0_19 = arith.constant 0 : index
      %42 = vector.load %arg5[%c0_18, %c0_19] : memref<128x128xbf16, #tpu.memory_space<vmem>>, vector<128x128xbf16>
      %cst_20 = arith.constant dense<0.000000e+00> : vector<8x128xf32>
      %43 = tpu.matmul %41, %42, %cst_20 {dimension_numbers = #tpu.dot_dimension_numbers<[1], [0], [0], [1], [0, 0, 1, 1], [], []>} : vector<8x128xbf16>, vector<128x128xbf16>, vector<8x128xf32> -> vector<8x128xf32>
      %44 = arith.addf %40, %43 : vector<8x128xf32>
      %c0_21 = arith.constant 0 : index
      %c0_22 = arith.constant 0 : index
      %45 = vector.load %arg8[%c0_21, %c0_22] : memref<8x128xf32, #tpu.memory_space<vmem>>, vector<8x128xf32>
      tpu.vector_store %arg8[%c0_21, %c0_22], %44 {strides = array<i32>} : memref<8x128xf32, #tpu.memory_space<vmem>>, vector<8x128xf32>,
      %c2_i32_23 = arith.constant 2 : i32
      %46 = arith.remsi %arg0, %c2_i32_23 : i32
      %c0_24 = arith.constant 0 : index
      %c0_25 = arith.constant 0 : index
      %47 = vector.load %arg10[%c0_24, %c0_25] : memref<8x128xbf16, #tpu.memory_space<vmem>>, vector<8x128xbf16>
      %c0_26 = arith.constant 0 : index
      %c0_27 = arith.constant 0 : index
      %48 = vector.load %arg2[%c0_26, %c0_27] : memref<128x128xbf16, #tpu.memory_space<vmem>>, vector<128x128xbf16>
      %cst_28 = arith.constant dense<0.000000e+00> : vector<8x128xf32>
      %49 = tpu.matmul %47, %48, %cst_28 {dimension_numbers = #tpu.dot_dimension_numbers<[1], [0], [0], [1], [0, 0, 1, 1], [], []>} : vector<8x128xbf16>, vector<128x128xbf16>, vector<8x128xf32> -> vector<8x128xf32>
      %50 = arith.index_cast %46 : i32 to index
      %c0_29 = arith.constant 0 : index
      %c0_30 = arith.constant 0 : index
      %51 = vector.load %arg9[%50, %c0_29, %c0_30] : memref<2x8x128xf32, #tpu.memory_space<vmem>>, vector<1x8x128xf32>
      %52 = vector.shape_cast %51 : vector<1x8x128xf32> to vector<8x128xf32>
      %53 = vector.shape_cast %49 : vector<8x128xf32> to vector<1x8x128xf32>
      tpu.vector_store %arg9[%50, %c0_29, %c0_30], %53 {strides = array<i32>} : memref<2x8x128xf32, #tpu.memory_space<vmem>>, vector<1x8x128xf32>,
    } else {
    }
    %c1_i32_3 = arith.constant 1 : i32
    %8 = arith.cmpi eq, %arg0, %c1_i32_3 : i32
    %9 = arith.extui %8 : i1 to i32
    %c0_i32_4 = arith.constant 0 : i32
    %10 = arith.cmpi ne, %9, %c0_i32_4 : i32
    scf.if %10 {
      %c1_i32_5 = arith.constant 1 : i32
      %11 = arith.subi %arg0, %c1_i32_5 : i32
      %c2_i32 = arith.constant 2 : i32
      %12 = arith.remsi %11, %c2_i32 : i32
      %13 = arith.index_cast %12 : i32 to index
      %c0 = arith.constant 0 : index
      %c0_6 = arith.constant 0 : index
      %14 = vector.load %arg9[%13, %c0, %c0_6] : memref<2x8x128xf32, #tpu.memory_space<vmem>>, vector<1x8x128xf32>
      %15 = vector.shape_cast %14 : vector<1x8x128xf32> to vector<8x128xf32>
      %cst = arith.constant dense<0.000000e+00> : vector<128xf32>
      %16 = vector.multi_reduction <add>, %15, %cst [0] : vector<8x128xf32> to vector<128xf32>
      %17 = vector.shape_cast %16 : vector<128xf32> to vector<1x128xf32>
      %cst_7 = arith.constant 1.250000e-01 : f32
      %18 = vector.broadcast %cst_7 : f32 to vector<1x128xf32>
      %19 = arith.mulf %17, %18 : vector<1x128xf32>
      %20 = vector.broadcast %19 : vector<1x128xf32> to vector<8x128xf32>
      %21 = arith.subf %15, %20 : vector<8x128xf32>
      %22 = arith.mulf %21, %21 : vector<8x128xf32>
      %cst_8 = arith.constant dense<0.000000e+00> : vector<128xf32>
      %23 = vector.multi_reduction <add>, %22, %cst_8 [0] : vector<8x128xf32> to vector<128xf32>
      %24 = vector.shape_cast %23 : vector<128xf32> to vector<1x128xf32>
      %cst_9 = arith.constant 1.250000e-01 : f32
      %25 = vector.broadcast %cst_9 : f32 to vector<1x128xf32>
      %26 = arith.mulf %24, %25 : vector<1x128xf32>
      %cst_10 = arith.constant 9.99999974E-6 : f32
      %27 = vector.broadcast %cst_10 : f32 to vector<1x128xf32>
      %28 = arith.addf %26, %27 : vector<1x128xf32>
      %29 = math.rsqrt %28 : vector<1x128xf32>
      %30 = vector.broadcast %29 : vector<1x128xf32> to vector<8x128xf32>
      %31 = arith.mulf %21, %30 : vector<8x128xf32>
      %c0_11 = arith.constant 0 : index
      %c0_12 = arith.constant 0 : index
      %32 = vector.load %arg3[%c0_11, %c0_12] : memref<1x128xf32, #tpu.memory_space<vmem>>, vector<1x128xf32>
      %33 = vector.broadcast %32 : vector<1x128xf32> to vector<8x128xf32>
      %34 = arith.mulf %31, %33 : vector<8x128xf32>
      %c0_13 = arith.constant 0 : index
      %c0_14 = arith.constant 0 : index
      %35 = vector.load %arg4[%c0_13, %c0_14] : memref<1x128xf32, #tpu.memory_space<vmem>>, vector<1x128xf32>
      %36 = vector.broadcast %35 : vector<1x128xf32> to vector<8x128xf32>
      %37 = arith.addf %34, %36 : vector<8x128xf32>
      %cst_15 = arith.constant 0.000000e+00 : f32
      %38 = vector.broadcast %cst_15 : f32 to vector<8x128xf32>
      %39 = arith.maximumf %37, %38 : vector<8x128xf32>
      %c0_16 = arith.constant 0 : index
      %c0_17 = arith.constant 0 : index
      %40 = vector.load %arg8[%c0_16, %c0_17] : memref<8x128xf32, #tpu.memory_space<vmem>>, vector<8x128xf32>
      %41 = arith.truncf %39 : vector<8x128xf32> to vector<8x128xbf16>
      %c0_18 = arith.constant 0 : index
      %c0_19 = arith.constant 0 : index
      %42 = vector.load %arg5[%c0_18, %c0_19] : memref<128x128xbf16, #tpu.memory_space<vmem>>, vector<128x128xbf16>
      %cst_20 = arith.constant dense<0.000000e+00> : vector<8x128xf32>
      %43 = tpu.matmul %41, %42, %cst_20 {dimension_numbers = #tpu.dot_dimension_numbers<[1], [0], [0], [1], [0, 0, 1, 1], [], []>} : vector<8x128xbf16>, vector<128x128xbf16>, vector<8x128xf32> -> vector<8x128xf32>
      %44 = arith.addf %40, %43 : vector<8x128xf32>
      %c0_21 = arith.constant 0 : index
      %c0_22 = arith.constant 0 : index
      %45 = vector.load %arg8[%c0_21, %c0_22] : memref<8x128xf32, #tpu.memory_space<vmem>>, vector<8x128xf32>
      tpu.vector_store %arg8[%c0_21, %c0_22], %44 {strides = array<i32>} : memref<8x128xf32, #tpu.memory_space<vmem>>, vector<8x128xf32>,
      %c0_23 = arith.constant 0 : index
      %c0_24 = arith.constant 0 : index
      %46 = vector.load %arg8[%c0_23, %c0_24] : memref<8x128xf32, #tpu.memory_space<vmem>>, vector<8x128xf32>
      %c0_25 = arith.constant 0 : index
      %c0_26 = arith.constant 0 : index
      %47 = vector.load %arg7[%c0_25, %c0_26] : memref<8x128xf32, #tpu.memory_space<vmem>>, vector<8x128xf32>
      tpu.vector_store %arg7[%c0_25, %c0_26], %46 {strides = array<i32>} : memref<8x128xf32, #tpu.memory_space<vmem>>, vector<8x128xf32>,
    } else {
    }
    return
  }
  func.func @transform_1(%arg0: i32) -> (i32, i32) {
    %c0_i32 = arith.constant 0 : i32
    %0 = arith.minsi %arg0, %c0_i32 : i32
    %c0_i32_0 = arith.constant 0 : i32
    %c0_i32_1 = arith.constant 0 : i32
    return %c0_i32_0, %0 : i32, i32
  }
  func.func @transform_2(%arg0: i32) -> (i32, i32) {
    %c1_i32 = arith.constant 1 : i32
    %0 = arith.subi %arg0, %c1_i32 : i32
    %c0_i32 = arith.constant 0 : i32
    %1 = arith.maxsi %0, %c0_i32 : i32
    %c0_i32_0 = arith.constant 0 : i32
    %c0_i32_1 = arith.constant 0 : i32
    return %c0_i32_0, %1 : i32, i32
  }
  func.func @transform_3(%arg0: i32) -> (i32, i32) {
    %c1_i32 = arith.constant 1 : i32
    %0 = arith.subi %arg0, %c1_i32 : i32
    %c0_i32 = arith.constant 0 : i32
    %1 = arith.maxsi %0, %c0_i32 : i32
    %c0_i32_0 = arith.constant 0 : i32
    %c0_i32_1 = arith.constant 0 : i32
    return %c0_i32_0, %1 : i32, i32
  }
  func.func @transform_4(%arg0: i32) -> (i32, i32) {
    %c1_i32 = arith.constant 1 : i32
    %0 = arith.subi %arg0, %c1_i32 : i32
    %c0_i32 = arith.constant 0 : i32
    %1 = arith.maxsi %0, %c0_i32 : i32
    %c0_i32_0 = arith.constant 0 : i32
    %c0_i32_1 = arith.constant 0 : i32
    return %1, %c0_i32_0 : i32, i32
  }
  func.func @transform_5(%arg0: i32) -> (i32, i32) {
    %c0_i32 = arith.constant 0 : i32
    %c0_i32_0 = arith.constant 0 : i32
    %c0_i32_1 = arith.constant 0 : i32
    return %c0_i32, %c0_i32_0 : i32, i32
  }
  func.func @transform_6(%arg0: i32) -> (i32, i32) {
    %c0_i32 = arith.constant 0 : i32
    %c0_i32_0 = arith.constant 0 : i32
    %c0_i32_1 = arith.constant 0 : i32
    return %c0_i32, %c0_i32_0 : i32, i32
  }
}

</mosaic_0001>

<llo_original>
// kernel: _mlp_forward_impl.1
$region0: #{_mlp_forward_impl.1}
  #allocation0 [shape = 'u32[]', space=smem, size = 0x4, offset = 0x4, fixed_abs, tag = 'smem constant byte address 0x4 - core index']
  #allocation1 [shape = 'u32[144,128]{1,0:T(1,128)}', space=vmem, size = 0x12000, scoped, tag = 'internal scratch']
  #allocation2 [shape = 'f32[8,128]{1,0:T(8,128)}', space=vmem, size = 0x1000, scoped, tag = 'scratch operand']
  #allocation3 [shape = 'f32[2,8,128]{2,1,0:T(8,128)}', space=vmem, size = 0x2000, scoped, tag = 'scratch operand']
  #allocation4 [shape = 'bf16[8,128]{1,0:T(8,128)(2,1)}', space=vmem, size = 0x800, scoped, tag = 'scratch operand']
  #allocation5 [shape = 's32[1]{0}', space=sflag, size = 0x4, scoped, tag = 'scratch operand']
  #allocation12 [shape = 's32[]', space=sflag, size = 0x4, offset = 0, fixed_abs, tag = 'sflag constant byte address 0x0 - dummy sync flag']
  %s0 = inlined_call_operand.vmem [shape: bf16[8,128], index: 0, kind: input, shape index: {}]
  %s1 = inlined_call_operand.hbm [shape: bf16[128,128], index: 1, kind: input, shape index: {}]
  %s2 = inlined_call_operand.vmem [shape: f32[1,128], index: 2, kind: input, shape index: {}]
  %s3 = inlined_call_operand.vmem [shape: f32[1,128], index: 3, kind: input, shape index: {}]
  %s4 = inlined_call_operand.hbm [shape: bf16[128,128], index: 4, kind: input, shape index: {}]
  %s5 = inlined_call_operand.vmem [shape: f32[1,128], index: 5, kind: input, shape index: {}]
  %s6 = inlined_call_operand.hbm [shape: f32[8,128], index: 6, kind: output, shape index: {}]
  %s7 = sld [smem:[#allocation0]]
  $region103: #{_mlp_forward_impl.1} parent=0
    _
  %s9 = ssub.s32 1, %s7
  %s10 = scalar_select 0, %s9, %s7
  $region1: #{_mlp_forward_impl.1} parent=0
    #allocation6 [shape = 'u8[65536]{0}', space=vmem, size = 0x10000, scoped, tag = 'input window, operand 1']
    #allocation7 [shape = 's32[2]{0}', space=sflag, size = 0x8, scoped, tag = 'scoped memory for _mlp_forward_impl.1']
    #allocation8 [shape = 's32[2]{0}', space=sflag, size = 0x8, scoped, tag = 'scoped memory for _mlp_forward_impl.1']
    #allocation9 [shape = 'u8[65536]{0}', space=vmem, size = 0x10000, scoped, tag = 'input window, operand 4']
    #allocation10 [shape = 's32[2]{0}', space=sflag, size = 0x8, scoped, tag = 'scoped memory for _mlp_forward_impl.1']
    #allocation11 [shape = 'u8[4096]{0}', space=vmem, size = 0x1000, scoped, tag = 'output window, operand 0, single buffered']
    %11 = vsyncpa [#allocation7], 0
    %s12 = scalar_lea.sflag [#allocation7], 1
    %13 = vsyncpa %s12, 0
    %14 = vsyncpa [#allocation10], 0
    %s15 = scalar_lea.sflag [#allocation10], 1
    %16 = vsyncpa %s15, 0
    %17 = vsyncpa [#allocation8], 0
    loop: start=0, step=1, limit=4
    $region2: #{_mlp_forward_impl.1} parent=1 // loop_pre_header
      _
    $region3: #{_mlp_forward_impl.1} parent=1 // loop_header
      %s19 = sphi 0, %s23
      %p20 = scmp.ge.s32.totalorder %s19, 4
      %s33 = sphi 0, %s35
      %s36 = sphi 0, %s33
      %s37 = sphi 0, %s36
      %s53 = sphi 0, %s37
      %s65 = sphi 0, %s67
      %s68 = sphi 0, %s65
      %s69 = sphi 0, %s68
      %s85 = sphi 0, %s69
      %s97 = sphi 0, %s99
      %s100 = sphi 0, %s97
      %s101 = sphi 0, %s100
      %s117 = sphi 0, %s101
      %s129 = sphi 0, %s131
      %s132 = sphi 0, %s129
      %s133 = sphi 0, %s132
      %s149 = sphi 0, %s133
      %s153 = sphi 0, %s153
      %s155 = sphi 0, %s153
      %s156 = sphi 0, %s155
      %s170 = sphi 0, %s156
      %s174 = sphi 0, %s174
      %s176 = sphi 0, %s174
      %s177 = sphi 0, %s176
      %s191 = sphi 0, %s177
    $region4: #{_mlp_forward_impl.1} parent=1 // loop_header_branch
      %22 = sbr.rel (%p20) target = $region8
    $region5: #{_mlp_forward_impl.1} parent=1 // loop_body
      %s24 = ssub.s32 %s19, 1
      %s25 = ssub.s32 %s19, 2
      %s26 = sadd.s32 %s19, 1
      %p27 = scmp.lt.s32.totalorder %s19, 0
      %s28 = scalar_select %p27, %s19, 0
      %p29 = scmp.lt.s32.totalorder %s26, 0
      %s30 = scalar_select %p29, %s26, 0
      %s31 = ssub.s32 %s28, %s30
      %p32 = scmp.eq.s32.totalorder %s31, 0
      %s34 = sadd.s32 %s33, 1
      %s35 = scalar_select %p32, %s33, %s34
      %p38 = pneg %p32
      %p39 = scmp.eq.s32.totalorder %s19, 1
      %p40 = por %p38, %p39
      %p41 = scmp.ne.s32.totalorder %s33, %s36
      %p42 = scmp.eq.s32.totalorder %s19, 0
      %p43 = por %p41, %p42
      %p44 = scmp.ne.s32.totalorder %s33, %s36
      %p45 = scmp.eq.s32.totalorder %s24, 1
      %p46 = por %p44, %p45
      %p47 = scmp.ne.s32.totalorder %s36, %s37
      %p48 = scmp.eq.s32.totalorder %s24, 0
      %p49 = por %p47, %p48
      %p50 = scmp.ne.s32.totalorder %s36, %s37
      %p51 = scmp.eq.s32.totalorder %s25, 1
      %p52 = por %p50, %p51
      %p54 = scmp.ne.s32.totalorder %s37, %s53
      %p55 = scmp.eq.s32.totalorder %s25, 0
      %p56 = por %p54, %p55
      %s57 = ssub.s32 %s19, 1
      %p58 = scmp.gt.s32.totalorder %s57, 0
      %s59 = scalar_select %p58, %s57, 0
      %s60 = ssub.s32 %s26, 1
      %p61 = scmp.gt.s32.totalorder %s60, 0
      %s62 = scalar_select %p61, %s60, 0
      %s63 = ssub.s32 %s59, %s62
      %p64 = scmp.eq.s32.totalorder %s63, 0
      %s66 = sadd.s32 %s65, 1
      %s67 = scalar_select %p64, %s65, %s66
      %p70 = pneg %p64
      %p71 = scmp.eq.s32.totalorder %s19, 1
      %p72 = por %p70, %p71
      %p73 = scmp.ne.s32.totalorder %s65, %s68
      %p74 = scmp.eq.s32.totalorder %s19, 0
      %p75 = por %p73, %p74
      %p76 = scmp.ne.s32.totalorder %s65, %s68
      %p77 = scmp.eq.s32.totalorder %s24, 1
      %p78 = por %p76, %p77
      %p79 = scmp.ne.s32.totalorder %s68, %s69
      %p80 = scmp.eq.s32.totalorder %s24, 0
      %p81 = por %p79, %p80
      %p82 = scmp.ne.s32.totalorder %s68, %s69
      %p83 = scmp.eq.s32.totalorder %s25, 1
      %p84 = por %p82, %p83
      %p86 = scmp.ne.s32.totalorder %s69, %s85
      %p87 = scmp.eq.s32.totalorder %s25, 0
      %p88 = por %p86, %p87
      %s89 = ssub.s32 %s19, 1
      %p90 = scmp.gt.s32.totalorder %s89, 0
      %s91 = scalar_select %p90, %s89, 0
      %s92 = ssub.s32 %s26, 1
      %p93 = scmp.gt.s32.totalorder %s92, 0
      %s94 = scalar_select %p93, %s92, 0
      %s95 = ssub.s32 %s91, %s94
      %p96 = scmp.eq.s32.totalorder %s95, 0
      %s98 = sadd.s32 %s97, 1
      %s99 = scalar_select %p96, %s97, %s98
      %p102 = pneg %p96
      %p103 = scmp.eq.s32.totalorder %s19, 1
      %p104 = por %p102, %p103
      %p105 = scmp.ne.s32.totalorder %s97, %s100
      %p106 = scmp.eq.s32.totalorder %s19, 0
      %p107 = por %p105, %p106
      %p108 = scmp.ne.s32.totalorder %s97, %s100
      %p109 = scmp.eq.s32.totalorder %s24, 1
      %p110 = por %p108, %p109
      %p111 = scmp.ne.s32.totalorder %s100, %s101
      %p112 = scmp.eq.s32.totalorder %s24, 0
      %p113 = por %p111, %p112
      %p114 = scmp.ne.s32.totalorder %s100, %s101
      %p115 = scmp.eq.s32.totalorder %s25, 1
      %p116 = por %p114, %p115
      %p118 = scmp.ne.s32.totalorder %s101, %s117
      %p119 = scmp.eq.s32.totalorder %s25, 0
      %p120 = por %p118, %p119
      %s121 = ssub.s32 %s19, 1
      %p122 = scmp.gt.s32.totalorder %s121, 0
      %s123 = scalar_select %p122, %s121, 0
      %s124 = ssub.s32 %s26, 1
      %p125 = scmp.gt.s32.totalorder %s124, 0
      %s126 = scalar_select %p125, %s124, 0
      %s127 = ssub.s32 %s123, %s126
      %p128 = scmp.eq.s32.totalorder %s127, 0
      %s130 = sadd.s32 %s129, 1
      %s131 = scalar_select %p128, %s129, %s130
      %p134 = pneg %p128
      %p135 = scmp.eq.s32.totalorder %s19, 1
      %p136 = por %p134, %p135
      %p137 = scmp.ne.s32.totalorder %s129, %s132
      %p138 = scmp.eq.s32.totalorder %s19, 0
      %p139 = por %p137, %p138
      %p140 = scmp.ne.s32.totalorder %s129, %s132
      %p141 = scmp.eq.s32.totalorder %s24, 1
      %p142 = por %p140, %p141
      %p143 = scmp.ne.s32.totalorder %s132, %s133
      %p144 = scmp.eq.s32.totalorder %s24, 0
      %p145 = por %p143, %p144
      %p146 = scmp.ne.s32.totalorder %s132, %s133
      %p147 = scmp.eq.s32.totalorder %s25, 1
      %p148 = por %p146, %p147
      %p150 = scmp.ne.s32.totalorder %s133, %s149
      %p151 = scmp.eq.s32.totalorder %s25, 0
      %p152 = por %p150, %p151
      %s154 = sadd.s32 %s153, 1
      %p157 = scmp.eq.s32.totalorder %s19, 1
      %p158 = scmp.ne.s32.totalorder %s153, %s155
      %p159 = scmp.eq.s32.totalorder %s19, 0
      %p160 = por %p158, %p159
      %p161 = scmp.ne.s32.totalorder %s153, %s155
      %p162 = scmp.eq.s32.totalorder %s24, 1
      %p163 = por %p161, %p162
      %p164 = scmp.ne.s32.totalorder %s155, %s156
      %p165 = scmp.eq.s32.totalorder %s24, 0
      %p166 = por %p164, %p165
      %p167 = scmp.ne.s32.totalorder %s155, %s156
      %p168 = scmp.eq.s32.totalorder %s25, 1
      %p169 = por %p167, %p168
      %p171 = scmp.ne.s32.totalorder %s156, %s170
      %p172 = scmp.eq.s32.totalorder %s25, 0
      %p173 = por %p171, %p172
      %s175 = sadd.s32 %s174, 1
      %p178 = scmp.eq.s32.totalorder %s19, 1
      %p179 = scmp.ne.s32.totalorder %s174, %s176
      %p180 = scmp.eq.s32.totalorder %s19, 0
      %p181 = por %p179, %p180
      %p182 = scmp.ne.s32.totalorder %s174, %s176
      %p183 = scmp.eq.s32.totalorder %s24, 1
      %p184 = por %p182, %p183
      %p185 = scmp.ne.s32.totalorder %s176, %s177
      %p186 = scmp.eq.s32.totalorder %s24, 0
      %p187 = por %p185, %p186
      %p188 = scmp.ne.s32.totalorder %s176, %s177
      %p189 = scmp.eq.s32.totalorder %s25, 1
      %p190 = por %p188, %p189
      %p192 = scmp.ne.s32.totalorder %s177, %s191
      %p193 = scmp.eq.s32.totalorder %s25, 0
      %p194 = por %p192, %p193
      %p195 = scmp.le.s32.totalorder 1, %s19
      %p196 = scmp.lt.s32.totalorder %s19, 3
      %p197 = pnand %p195, %p196
      %p198 = pneg %p197
      // Predicated region
      $region9: #{_mlp_forward_impl.1} parent=5 // pred_check
        _
      $region10: #{_mlp_forward_impl.1} parent=5 // pred_check_branch
        %200 = sbr.rel (%p197) target = $region12
      $region11: #{_mlp_forward_impl.1} parent=5 // pred_region
        %s201 = ssub.s32 %s19, 1
        // Predicated region
        $region13: #{_mlp_forward_impl.1} parent=11 // pred_check
          %p202 = pneg %p166
        $region14: #{_mlp_forward_impl.1} parent=11 // pred_check_branch
          %204 = sbr.rel (%p202) target = $region16
        $region15: #{_mlp_forward_impl.1} parent=11 // pred_region
          _
        $region16: #{_mlp_forward_impl.1} parent=11 // pred_fallthru
          _
      $region12: #{_mlp_forward_impl.1} parent=5 // pred_fallthru
        _
      %p205 = scmp.lt.s32.totalorder %s19, 2
      // Predicated region
      $region17: #{_mlp_forward_impl.1} parent=5 // pred_check
        %p206 = pneg %p205
      $region18: #{_mlp_forward_impl.1} parent=5 // pred_check_branch
        %208 = sbr.rel (%p206) target = $region20
      $region19: #{_mlp_forward_impl.1} parent=5 // pred_region
        // Predicated region
        $region21: #{_mlp_forward_impl.1} parent=19 // pred_check
          %p209 = pneg %p43
        $region22: #{_mlp_forward_impl.1} parent=19 // pred_check_branch
          %211 = sbr.rel (%p209) target = $region24
        $region23: #{_mlp_forward_impl.1} parent=19 // pred_region
          %s212 = sand.u32 %s33, 1
          %s213 = scalar_lea.sflag [#allocation7], %s212
          %s214 = sand.u32 %s33, 1
          %s215 = smul.addr %s214, 64
          %s216 = scalar_lea.vmem [#allocation6], %s215
          %p217 = scmp.lt.s32.totalorder %s19, 0
          %s218 = scalar_select %p217, %s19, 0
          %s220 = ssub.s32 1024, 1024
          %221 = vsyncadd %s213, %s220
          %s222 = smul.addr %s218, 64
          %s223 = scalar_lea.hbm %s1, %s222
          %s224 = sshll.u32 %s216, 4
          %s225 = int_to_ptr.vmem [resolvable:$true] %s224
          %230 = dma.hbm_to_vmem [thread:$0]  %s223, 1024, %s225, %s213, 64, 64, 4
        $region24: #{_mlp_forward_impl.1} parent=19 // pred_fallthru
          _
        // Predicated region
        $region25: #{_mlp_forward_impl.1} parent=19 // pred_check
          %p231 = pneg %p75
        $region26: #{_mlp_forward_impl.1} parent=19 // pred_check_branch
          %233 = sbr.rel (%p231) target = $region28
        $region27: #{_mlp_forward_impl.1} parent=19 // pred_region
          %s234 = ssub.s32 %s19, 1
          %p235 = scmp.gt.s32.totalorder %s234, 0
          %s236 = scalar_select %p235, %s234, 0
          %p237 = scmp.lt.s32.totalorder %s236, 0
          %s238 = scalar_select %p237, %s236, 0
          %s239 = scalar_lea.vmem %s2, %s238
          %s240 = ssub.s32 %s19, 1
          %p241 = scmp.gt.s32.totalorder %s240, 0
          %s242 = scalar_select %p241, %s240, 0
        $region28: #{_mlp_forward_impl.1} parent=19 // pred_fallthru
          _
        // Predicated region
        $region29: #{_mlp_forward_impl.1} parent=19 // pred_check
          %p243 = pneg %p107
        $region30: #{_mlp_forward_impl.1} parent=19 // pred_check_branch
          %245 = sbr.rel (%p243) target = $region32
        $region31: #{_mlp_forward_impl.1} parent=19 // pred_region
          %s246 = ssub.s32 %s19, 1
          %p247 = scmp.gt.s32.totalorder %s246, 0
          %s248 = scalar_select %p247, %s246, 0
          %p249 = scmp.lt.s32.totalorder %s248, 0
          %s250 = scalar_select %p249, %s248, 0
          %s251 = scalar_lea.vmem %s3, %s250
          %s252 = ssub.s32 %s19, 1
          %p253 = scmp.gt.s32.totalorder %s252, 0
          %s254 = scalar_select %p253, %s252, 0
        $region32: #{_mlp_forward_impl.1} parent=19 // pred_fallthru
          _
        // Predicated region
        $region33: #{_mlp_forward_impl.1} parent=19 // pred_check
          %p255 = pneg %p139
        $region34: #{_mlp_forward_impl.1} parent=19 // pred_check_branch
          %257 = sbr.rel (%p255) target = $region36
        $region35: #{_mlp_forward_impl.1} parent=19 // pred_region
          %s258 = sand.u32 %s129, 1
          %s259 = scalar_lea.sflag [#allocation10], %s258
          %s260 = sand.u32 %s129, 1
          %s261 = smul.addr %s260, 64
          %s262 = scalar_lea.vmem [#allocation9], %s261
          %s263 = ssub.s32 %s19, 1
          %p264 = scmp.gt.s32.totalorder %s263, 0
          %s265 = scalar_select %p264, %s263, 0
          %s266 = smul.u32 16, %s265
          %s268 = ssub.s32 1024, 1024
          %269 = vsyncadd %s259, %s268
          %s270 = smul.addr %s266, 64
          %s271 = scalar_lea.hbm %s4, %s270
          %s272 = sshll.u32 %s262, 4
          %s273 = int_to_ptr.vmem [resolvable:$true] %s272
          %278 = dma.hbm_to_vmem [thread:$0]  %s271, 1024, %s273, %s259, 64, 64, 4
        $region36: #{_mlp_forward_impl.1} parent=19 // pred_fallthru
          _
      $region20: #{_mlp_forward_impl.1} parent=5 // pred_fallthru
        _
      %p279 = scmp.le.s32.totalorder 1, %s19
      %p280 = scmp.lt.s32.totalorder %s19, 3
      %p281 = pnand %p279, %p280
      %p282 = pneg %p281
      // Predicated region
      $region37: #{_mlp_forward_impl.1} parent=5 // pred_check
        _
      $region38: #{_mlp_forward_impl.1} parent=5 // pred_check_branch
        %284 = sbr.rel (%p281) target = $region40
      $region39: #{_mlp_forward_impl.1} parent=5 // pred_region
        %s285 = ssub.s32 %s19, 1
        %s286 = sand.u32 %s36, 1
        %s287 = scalar_lea.sflag [#allocation7], %s286
        %s288 = sand.u32 %s36, 1
        %s289 = smul.addr %s288, 64
        %s290 = scalar_lea.vmem [#allocation6], %s289
        // Predicated region
        $region41: #{_mlp_forward_impl.1} parent=39 // pred_check
          %p291 = pneg %p49
        $region42: #{_mlp_forward_impl.1} parent=39 // pred_check_branch
          %293 = sbr.rel (%p291) target = $region44
        $region43: #{_mlp_forward_impl.1} parent=39 // pred_region
          %294 = dma.done %s287, 1024
        $region44: #{_mlp_forward_impl.1} parent=39 // pred_fallthru
          _
        %s295 = sand.u32 %s132, 1
        %s296 = scalar_lea.sflag [#allocation10], %s295
        %s297 = sand.u32 %s132, 1
        %s298 = smul.addr %s297, 64
        %s299 = scalar_lea.vmem [#allocation9], %s298
        // Predicated region
        $region45: #{_mlp_forward_impl.1} parent=39 // pred_check
          %p300 = pneg %p145
        $region46: #{_mlp_forward_impl.1} parent=39 // pred_check_branch
          %302 = sbr.rel (%p300) target = $region48
        $region47: #{_mlp_forward_impl.1} parent=39 // pred_region
          %303 = dma.done %s296, 1024
        $region48: #{_mlp_forward_impl.1} parent=39 // pred_fallthru
          _
        %s304 = sand.u32 %s36, 1
        %s305 = scalar_lea.sflag [#allocation7], %s304
        %s306 = sand.u32 %s36, 1
        %s307 = smul.addr %s306, 64
        %s308 = scalar_lea.vmem [#allocation6], %s307
        %p309 = pneg %p49
        %p310 = pneg %p46
        %s311 = ssub.s32 %s24, 1
        %p312 = scmp.gt.s32.totalorder %s311, 0
        %s313 = scalar_select %p312, %s311, 0
        %p314 = scmp.lt.s32.totalorder %s313, 0
        %s315 = scalar_select %p314, %s313, 0
        %s316 = scalar_lea.vmem %s2, %s315
        %p317 = pneg %p81
        %p318 = pneg %p78
        %s319 = ssub.s32 %s24, 1
        %p320 = scmp.gt.s32.totalorder %s319, 0
        %s321 = scalar_select %p320, %s319, 0
        %p322 = scmp.lt.s32.totalorder %s321, 0
        %s323 = scalar_select %p322, %s321, 0
        %s324 = scalar_lea.vmem %s3, %s323
        %p325 = pneg %p113
        %p326 = pneg %p110
        %s327 = sand.u32 %s132, 1
        %s328 = scalar_lea.sflag [#allocation10], %s327
        %s329 = sand.u32 %s132, 1
        %s330 = smul.addr %s329, 64
        %s331 = scalar_lea.vmem [#allocation9], %s330
        %p332 = pneg %p145
        %p333 = pneg %p142
        %p334 = pneg %p166
        %p335 = pneg %p163
        %p336 = pneg %p187
        %p337 = pneg %p184
        %p338 = scmp.lt.s32.totalorder %s24, 0
        %s339 = scalar_select %p338, %s24, 0
        %s340 = ssub.s32 %s24, 1
        %p341 = scmp.gt.s32.totalorder %s340, 0
        %s342 = scalar_select %p341, %s340, 0
        %p343 = scmp.lt.s32.totalorder %s342, 0
        %s344 = scalar_select %p343, %s342, 0
        %s345 = scalar_lea.vmem %s2, %s344
        %s346 = ssub.s32 %s24, 1
        %p347 = scmp.gt.s32.totalorder %s346, 0
        %s348 = scalar_select %p347, %s346, 0
        %s349 = ssub.s32 %s24, 1
        %p350 = scmp.gt.s32.totalorder %s349, 0
        %s351 = scalar_select %p350, %s349, 0
        %p352 = scmp.lt.s32.totalorder %s351, 0
        %s353 = scalar_select %p352, %s351, 0
        %s354 = scalar_lea.vmem %s3, %s353
        %s355 = ssub.s32 %s24, 1
        %p356 = scmp.gt.s32.totalorder %s355, 0
        %s357 = scalar_select %p356, %s355, 0
        %s358 = ssub.s32 %s24, 1
        %p359 = scmp.gt.s32.totalorder %s358, 0
        %s360 = scalar_select %p359, %s358, 0
        %s361 = smul.u32 16, %s360
        %p363 = scmp.eq.s32.totalorder %s24, 0
        // Predicated region
        $region49: #{_mlp_forward_impl.1} parent=39 // pred_check
          %p364 = pneg %p363
        $region50: #{_mlp_forward_impl.1} parent=39 // pred_check_branch
          %366 = sbr.rel (%p364) target = $region52
        $region51: #{_mlp_forward_impl.1} parent=39 // pred_region
          %p368 = scmp.lt.u32.totalorder 4, 8
          %p369 = pneg %p368
          // Predicated region
          $region53: #{_mlp_forward_impl.1} parent=51 // pred_check
            _
          $region54: #{_mlp_forward_impl.1} parent=51 // pred_check_branch
            %371 = sbr.rel (%p368) target = $region56
          $region55: #{_mlp_forward_impl.1} parent=51 // pred_region
            %s387 = sand.u32 4, 7
            %p388 = scmp.eq.s32.totalorder %s387, 0
            %p389 = pneg %p388
            // Predicated region
            $region68: #{_mlp_forward_impl.1} parent=55 // pred_check
              _
            $region69: #{_mlp_forward_impl.1} parent=55 // pred_check_branch
              %391 = sbr.rel (%p388) target = $region71
            $region70: #{_mlp_forward_impl.1} parent=55 // pred_region
              %s392 = sand.u32 4, 7
              %s393 = ssub.s32 4, %s392
              %s394 = scalar_lea.vmem %s0, %s393
              %s395 = ssub.s32 4, %s392
              %s396 = scalar_lea.vmem [#allocation4], %s395
              %s397 = sshll.u32 1, %s392
              %s398 = ssub.s32 %s397, 1
              loop: start=0, step=1, limit=1
              $region72: #{_mlp_forward_impl.1} parent=70 // loop_pre_header
                _
              $region73: #{_mlp_forward_impl.1} parent=70 // loop_header
                %s400 = sphi 0, %s404
                %p401 = scmp.ge.s32.totalorder %s400, 1
                %s405 = sphi %s394, %s394
                %s406 = sphi %s396, %s396
              $region74: #{_mlp_forward_impl.1} parent=70 // loop_header_branch
                %403 = sbr.rel (%p401) target = $region78
              $region75: #{_mlp_forward_impl.1} parent=70 // loop_body
                %v407 = vld [vmem:[%s405] sm:%s398]
                %408 = vst [vmem:[%s406] sm:%s398] %v407
              $region76: #{_mlp_forward_impl.1} parent=70 // loop_footer
                %s404 = sadd.s32 1, %s400
              $region77: #{_mlp_forward_impl.1} parent=70 // loop_footer_branch
                %399 = sbr.rel target = $region73
              $region78: #{_mlp_forward_impl.1} parent=70 // loop_exit
                _
            $region71: #{_mlp_forward_impl.1} parent=55 // pred_fallthru
              _
          $region56: #{_mlp_forward_impl.1} parent=51 // pred_fallthru
            _
          // Predicated region
          $region57: #{_mlp_forward_impl.1} parent=51 // pred_check
            %p372 = pneg %p368
          $region58: #{_mlp_forward_impl.1} parent=51 // pred_check_branch
            %374 = sbr.rel (%p372) target = $region60
          $region59: #{_mlp_forward_impl.1} parent=51 // pred_region
            %s375 = sshll.u32 1, 4
            %s376 = ssub.s32 %s375, 1
            loop: start=0, step=1, limit=1
            $region61: #{_mlp_forward_impl.1} parent=59 // loop_pre_header
              _
            $region62: #{_mlp_forward_impl.1} parent=59 // loop_header
              %s378 = sphi 0, %s382
              %p379 = scmp.ge.s32.totalorder %s378, 1
              %s383 = sphi %s0, %s0
              %s384 = sphi [#allocation4], [#allocation4]
            $region63: #{_mlp_forward_impl.1} parent=59 // loop_header_branch
              %381 = sbr.rel (%p379) target = $region67
            $region64: #{_mlp_forward_impl.1} parent=59 // loop_body
              %v385 = vld [vmem:[%s383] sm:%s376]
              %386 = vst [vmem:[%s384] sm:%s376] %v385
            $region65: #{_mlp_forward_impl.1} parent=59 // loop_footer
              %s382 = sadd.s32 1, %s378
            $region66: #{_mlp_forward_impl.1} parent=59 // loop_footer_branch
              %377 = sbr.rel target = $region62
            $region67: #{_mlp_forward_impl.1} parent=59 // loop_exit
              _
          $region60: #{_mlp_forward_impl.1} parent=51 // pred_fallthru
            _
          // Predicated region
          $region79: #{_mlp_forward_impl.1} parent=51 // pred_check
            _
          $region80: #{_mlp_forward_impl.1} parent=51 // pred_check_branch
            %411 = sbr.rel (0) target = $region82
          $region81: #{_mlp_forward_impl.1} parent=51 // pred_region
            %412 = vsyncadd [#allocation5], 64
          $region82: #{_mlp_forward_impl.1} parent=51 // pred_fallthru
            _
          %s413 = smul.u32 4, 1
          %s414 = smul.u32 %s413, 1
          %s415 = sshll.u32 %s414, 4
          %416 = dma.done [#allocation5], %s415
          %v417 = vld [vmem:[%s5] sm:$0x1]
          %v419 = vlaneseq
          %v420 = vshrl.u32 %v419, 7
          %v421 = vsub.s32 0, %v420
          %v422 = vrot.slane %v417, %v421
          %424 = vst [vmem:[#allocation2] sm:$0xff] %v422
          %v425 = vld [vmem:[#allocation4] sm:$0xf]
          %v426 = vld [vmem:[%s290] sm:$0xf]
          %v427 = vld [vmem:[%s290 + $0x4] sm:$0xf]
          %v428 = vld [vmem:[%s290 + $0x8] sm:$0xf]
          %v429 = vld [vmem:[%s290 + $0xc] sm:$0xf]
          %v430 = vld [vmem:[%s290 + $0x10] sm:$0xf]
          %v431 = vld [vmem:[%s290 + $0x14] sm:$0xf]
          %v432 = vld [vmem:[%s290 + $0x18] sm:$0xf]
          %v433 = vld [vmem:[%s290 + $0x1c] sm:$0xf]
          %v434 = vld [vmem:[%s290 + $0x20] sm:$0xf]
          %v435 = vld [vmem:[%s290 + $0x24] sm:$0xf]
          %v436 = vld [vmem:[%s290 + $0x28] sm:$0xf]
          %v437 = vld [vmem:[%s290 + $0x2c] sm:$0xf]
          %v438 = vld [vmem:[%s290 + $0x30] sm:$0xf]
          %v439 = vld [vmem:[%s290 + $0x34] sm:$0xf]
          %v440 = vld [vmem:[%s290 + $0x38] sm:$0xf]
          %v441 = vld [vmem:[%s290 + $0x3c] sm:$0xf]
          %v458 = vunpack.c.l.b16 %v426
          %v459 = vunpack.c.l.b16 %v427
          %v460 = vunpack.c.l.b16 %v428
          %v461 = vunpack.c.l.b16 %v429
          %v462 = vunpack.c.l.b16 %v430
          %v463 = vunpack.c.l.b16 %v431
          %v464 = vunpack.c.l.b16 %v432
          %v465 = vunpack.c.l.b16 %v433
          %v466 = vunpack.c.l.b16 %v434
          %v467 = vunpack.c.l.b16 %v435
          %v468 = vunpack.c.l.b16 %v436
          %v469 = vunpack.c.l.b16 %v437
          %v470 = vunpack.c.l.b16 %v438
          %v471 = vunpack.c.l.b16 %v439
          %v472 = vunpack.c.l.b16 %v440
          %v473 = vunpack.c.l.b16 %v441
          %v474 = vpack.c.b16 %v459, %v458
          %v475 = vpack.c.b16 %v461, %v460
          %v476 = vpack.c.b16 %v463, %v462
          %v477 = vpack.c.b16 %v465, %v464
          %v478 = vpack.c.b16 %v467, %v466
          %v479 = vpack.c.b16 %v469, %v468
          %v480 = vpack.c.b16 %v471, %v470
          %v481 = vpack.c.b16 %v473, %v472
          %490 = vmatprep.subr.bf16.mxu0 0
          %491 = vmatpush1.bf16.msra.mxu0 %v481
          %492 = vmatprep.subr.bf16.mxu0 0
          %493 = vmatpush1.bf16.msra.mxu0 %v480
          %494 = vmatprep.subr.bf16.mxu0 0
          %495 = vmatpush1.bf16.msra.mxu0 %v479
          %496 = vmatprep.subr.bf16.mxu0 0
          %497 = vmatpush1.bf16.msra.mxu0 %v478
          %498 = vmatprep.subr.bf16.mxu0 0
          %499 = vmatpush1.bf16.msra.mxu0 %v477
          %500 = vmatprep.subr.bf16.mxu0 0
          %501 = vmatpush1.bf16.msra.mxu0 %v476
          %502 = vmatprep.subr.bf16.mxu0 0
          %503 = vmatpush1.bf16.msra.mxu0 %v475
          %504 = vmatprep.subr.bf16.mxu0 0
          %505 = vmatpush1.bf16.msra.mxu0 %v474
          %506 = vmatprep.subr.bf16.mxu0 0
          %507 = vmatpush2.bf16.msra.mxu0 0
          %508 = vmatprep.subr.bf16.mxu0 0
          %509 = vmatpush2.bf16.msra.mxu0 0
          %510 = vmatprep.subr.bf16.mxu0 0
          %511 = vmatpush2.bf16.msra.mxu0 0
          %512 = vmatprep.subr.bf16.mxu0 0
          %513 = vmatpush2.bf16.msra.mxu0 0
          %514 = vmatprep.subr.bf16.mxu0 0
          %515 = vmatpush2.bf16.msra.mxu0 0
          %516 = vmatprep.subr.bf16.mxu0 0
          %517 = vmatpush2.bf16.msra.mxu0 0
          %518 = vmatprep.subr.bf16.mxu0 0
          %519 = vmatpush2.bf16.msra.mxu0 0
          %520 = vmatprep.subr.bf16.mxu0 0
          %521 = vmatpush2.bf16.msra.mxu0 0
          %522 = vmatprep.mubr.bf16.mxu0 0
          %523 = vmatmul.mubr.bf16.gmra.mxu0 %v425
          %v524 = vpop.f32.mrf.mxu0
          %v525 = vadd.f32 0.0, %v524
          %v526 = vpop.f32.mrf.mxu0
          %v527 = vpop.f32.mrf.mxu0
          %v528 = vpop.f32.mrf.mxu0
          %529 = vdwg.mxu0
          %530 = vst [vmem:[#allocation3] sm:$0xff] %v525
        $region52: #{_mlp_forward_impl.1} parent=39 // pred_fallthru
          _
        %p531 = scmp.gt.s32.totalorder %s24, 0
        %p532 = scmp.lt.s32.totalorder %s24, 1
        %p533 = pnand %p531, %p532
        %p534 = pneg %p533
        // Predicated region
        $region83: #{_mlp_forward_impl.1} parent=39 // pred_check
          _
        $region84: #{_mlp_forward_impl.1} parent=39 // pred_check_branch
          %536 = sbr.rel (%p533) target = $region86
        $region85: #{_mlp_forward_impl.1} parent=39 // pred_region
          %s537 = ssub.s32 %s24, 1
          %p538 = scmp.lt.s32.totalorder %s537, 0
          %s539 = ssub.s32 0, %s537
          %s540 = scalar_select %p538, %s539, %s537
          %s541 = sand.u32 %s540, 1
          %s542 = ssub.s32 0, %s541
          %s543 = scalar_select %p538, %s542, %s541
          %s544 = smul.u32 %s543, 8
          %s545 = scalar_lea.vmem [#allocation3], %s544
          %v546 = vld [vmem:[%s545] sm:$0xff]
          %v547 = vrot.slane %v546, 4
          %v548 = vadd.f32 %v546, %v547
          %v549 = vrot.slane %v548, 2
          %v550 = vadd.f32 %v548, %v549
          %v551 = vrot.slane %v550, 1
          %v552 = vadd.f32 %v550, %v551
          %v553 = vmul.f32 %v552, 0.125
          %v554 = vsub.f32 %v546, %v553
          %v555 = vmul.f32 %v554, %v554
          %v556 = vrot.slane %v555, 4
          %v557 = vadd.f32 %v555, %v556
          %v558 = vrot.slane %v557, 2
          %v559 = vadd.f32 %v557, %v558
          %v560 = vrot.slane %v559, 1
          %v561 = vadd.f32 %v559, %v560
          %v562 = vmul.f32 %v561, 0.125
          %v563 = vadd.f32 %v562, 1e-05
          %v564 = vrsqrt.pop %v563
          %v565 = vmul.f32 %v554, %v564
          %v566 = vld [vmem:[%s345] sm:$0x1]
          %v568 = vlaneseq
          %v569 = vshrl.u32 %v568, 7
          %v570 = vsub.s32 0, %v569
          %v571 = vrot.slane %v566, %v570
          %v573 = vmul.f32 %v565, %v571
          %v574 = vld [vmem:[%s354] sm:$0x1]
          %v576 = vlaneseq
          %v577 = vshrl.u32 %v576, 7
          %v578 = vsub.s32 0, %v577
          %v579 = vrot.slane %v574, %v578
          %v581 = vadd.f32 %v573, %v579
          %v582 = vmax.f32 %v581, 0.0
          %v583 = vld [vmem:[#allocation2] sm:$0xff]
          %v584 = vpack.c.bf16 %v582, %v582
          %v585 = vld [vmem:[%s299] sm:$0xf]
          %v586 = vld [vmem:[%s299 + $0x4] sm:$0xf]
          %v587 = vld [vmem:[%s299 + $0x8] sm:$0xf]
          %v588 = vld [vmem:[%s299 + $0xc] sm:$0xf]
          %v589 = vld [vmem:[%s299 + $0x10] sm:$0xf]
          %v590 = vld [vmem:[%s299 + $0x14] sm:$0xf]
          %v591 = vld [vmem:[%s299 + $0x18] sm:$0xf]
          %v592 = vld [vmem:[%s299 + $0x1c] sm:$0xf]
          %v593 = vld [vmem:[%s299 + $0x20] sm:$0xf]
          %v594 = vld [vmem:[%s299 + $0x24] sm:$0xf]
          %v595 = vld [vmem:[%s299 + $0x28] sm:$0xf]
          %v596 = vld [vmem:[%s299 + $0x2c] sm:$0xf]
          %v597 = vld [vmem:[%s299 + $0x30] sm:$0xf]
          %v598 = vld [vmem:[%s299 + $0x34] sm:$0xf]
          %v599 = vld [vmem:[%s299 + $0x38] sm:$0xf]
          %v600 = vld [vmem:[%s299 + $0x3c] sm:$0xf]
          %v617 = vunpack.c.l.b16 %v585
          %v618 = vunpack.c.l.b16 %v586
          %v619 = vunpack.c.l.b16 %v587
          %v620 = vunpack.c.l.b16 %v588
          %v621 = vunpack.c.l.b16 %v589
          %v622 = vunpack.c.l.b16 %v590
          %v623 = vunpack.c.l.b16 %v591
          %v624 = vunpack.c.l.b16 %v592
          %v625 = vunpack.c.l.b16 %v593
          %v626 = vunpack.c.l.b16 %v594
          %v627 = vunpack.c.l.b16 %v595
          %v628 = vunpack.c.l.b16 %v596
          %v629 = vunpack.c.l.b16 %v597
          %v630 = vunpack.c.l.b16 %v598
          %v631 = vunpack.c.l.b16 %v599
          %v632 = vunpack.c.l.b16 %v600
          %v633 = vpack.c.b16 %v618, %v617
          %v634 = vpack.c.b16 %v620, %v619
          %v635 = vpack.c.b16 %v622, %v621
          %v636 = vpack.c.b16 %v624, %v623
          %v637 = vpack.c.b16 %v626, %v625
          %v638 = vpack.c.b16 %v628, %v627
          %v639 = vpack.c.b16 %v630, %v629
          %v640 = vpack.c.b16 %v632, %v631
          %649 = vmatprep.subr.bf16.mxu0 0
          %650 = vmatpush1.bf16.msra.mxu0 %v640
          %651 = vmatprep.subr.bf16.mxu0 0
          %652 = vmatpush1.bf16.msra.mxu0 %v639
          %653 = vmatprep.subr.bf16.mxu0 0
          %654 = vmatpush1.bf16.msra.mxu0 %v638
          %655 = vmatprep.subr.bf16.mxu0 0
          %656 = vmatpush1.bf16.msra.mxu0 %v637
          %657 = vmatprep.subr.bf16.mxu0 0
          %658 = vmatpush1.bf16.msra.mxu0 %v636
          %659 = vmatprep.subr.bf16.mxu0 0
          %660 = vmatpush1.bf16.msra.mxu0 %v635
          %661 = vmatprep.subr.bf16.mxu0 0
          %662 = vmatpush1.bf16.msra.mxu0 %v634
          %663 = vmatprep.subr.bf16.mxu0 0
          %664 = vmatpush1.bf16.msra.mxu0 %v633
          %665 = vmatprep.subr.bf16.mxu0 0
          %666 = vmatpush2.bf16.msra.mxu0 0
          %667 = vmatprep.subr.bf16.mxu0 0
          %668 = vmatpush2.bf16.msra.mxu0 0
          %669 = vmatprep.subr.bf16.mxu0 0
          %670 = vmatpush2.bf16.msra.mxu0 0
          %671 = vmatprep.subr.bf16.mxu0 0
          %672 = vmatpush2.bf16.msra.mxu0 0
          %673 = vmatprep.subr.bf16.mxu0 0
          %674 = vmatpush2.bf16.msra.mxu0 0
          %675 = vmatprep.subr.bf16.mxu0 0
          %676 = vmatpush2.bf16.msra.mxu0 0
          %677 = vmatprep.subr.bf16.mxu0 0
          %678 = vmatpush2.bf16.msra.mxu0 0
          %679 = vmatprep.subr.bf16.mxu0 0
          %680 = vmatpush2.bf16.msra.mxu0 0
          %681 = vmatprep.mubr.bf16.mxu0 0
          %682 = vmatmul.mubr.bf16.gmra.mxu0 %v584
          %v683 = vpop.f32.mrf.mxu0
          %v684 = vadd.f32 0.0, %v683
          %v685 = vpop.f32.mrf.mxu0
          %v686 = vpop.f32.mrf.mxu0
          %v687 = vpop.f32.mrf.mxu0
          %688 = vdwg.mxu0
          %v689 = vadd.f32 %v583, %v684
          %690 = vst [vmem:[#allocation2] sm:$0xff] %v689
          %p691 = scmp.lt.s32.totalorder %s24, 0
          %s692 = ssub.s32 0, %s24
          %s693 = scalar_select %p691, %s692, %s24
          %s694 = sand.u32 %s693, 1
          %s695 = ssub.s32 0, %s694
          %s696 = scalar_select %p691, %s695, %s694
          %v697 = vld [vmem:[#allocation4] sm:$0xf]
          %v698 = vld [vmem:[%s290] sm:$0xf]
          %v699 = vld [vmem:[%s290 + $0x4] sm:$0xf]
          %v700 = vld [vmem:[%s290 + $0x8] sm:$0xf]
          %v701 = vld [vmem:[%s290 + $0xc] sm:$0xf]
          %v702 = vld [vmem:[%s290 + $0x10] sm:$0xf]
          %v703 = vld [vmem:[%s290 + $0x14] sm:$0xf]
          %v704 = vld [vmem:[%s290 + $0x18] sm:$0xf]
          %v705 = vld [vmem:[%s290 + $0x1c] sm:$0xf]
          %v706 = vld [vmem:[%s290 + $0x20] sm:$0xf]
          %v707 = vld [vmem:[%s290 + $0x24] sm:$0xf]
          %v708 = vld [vmem:[%s290 + $0x28] sm:$0xf]
          %v709 = vld [vmem:[%s290 + $0x2c] sm:$0xf]
          %v710 = vld [vmem:[%s290 + $0x30] sm:$0xf]
          %v711 = vld [vmem:[%s290 + $0x34] sm:$0xf]
          %v712 = vld [vmem:[%s290 + $0x38] sm:$0xf]
          %v713 = vld [vmem:[%s290 + $0x3c] sm:$0xf]
          %v730 = vunpack.c.l.b16 %v698
          %v731 = vunpack.c.l.b16 %v699
          %v732 = vunpack.c.l.b16 %v700
          %v733 = vunpack.c.l.b16 %v701
          %v734 = vunpack.c.l.b16 %v702
          %v735 = vunpack.c.l.b16 %v703
          %v736 = vunpack.c.l.b16 %v704
          %v737 = vunpack.c.l.b16 %v705
          %v738 = vunpack.c.l.b16 %v706
          %v739 = vunpack.c.l.b16 %v707
          %v740 = vunpack.c.l.b16 %v708
          %v741 = vunpack.c.l.b16 %v709
          %v742 = vunpack.c.l.b16 %v710
          %v743 = vunpack.c.l.b16 %v711
          %v744 = vunpack.c.l.b16 %v712
          %v745 = vunpack.c.l.b16 %v713
          %v746 = vpack.c.b16 %v731, %v730
          %v747 = vpack.c.b16 %v733, %v732
          %v748 = vpack.c.b16 %v735, %v734
          %v749 = vpack.c.b16 %v737, %v736
          %v750 = vpack.c.b16 %v739, %v738
          %v751 = vpack.c.b16 %v741, %v740
          %v752 = vpack.c.b16 %v743, %v742
          %v753 = vpack.c.b16 %v745, %v744
          %762 = vmatprep.subr.bf16.mxu0 0
          %763 = vmatpush1.bf16.msra.mxu0 %v753
          %764 = vmatprep.subr.bf16.mxu0 0
          %765 = vmatpush1.bf16.msra.mxu0 %v752
          %766 = vmatprep.subr.bf16.mxu0 0
          %767 = vmatpush1.bf16.msra.mxu0 %v751
          %768 = vmatprep.subr.bf16.mxu0 0
          %769 = vmatpush1.bf16.msra.mxu0 %v750
          %770 = vmatprep.subr.bf16.mxu0 0
          %771 = vmatpush1.bf16.msra.mxu0 %v749
          %772 = vmatprep.subr.bf16.mxu0 0
          %773 = vmatpush1.bf16.msra.mxu0 %v748
          %774 = vmatprep.subr.bf16.mxu0 0
          %775 = vmatpush1.bf16.msra.mxu0 %v747
          %776 = vmatprep.subr.bf16.mxu0 0
          %777 = vmatpush1.bf16.msra.mxu0 %v746
          %778 = vmatprep.subr.bf16.mxu0 0
          %779 = vmatpush2.bf16.msra.mxu0 0
          %780 = vmatprep.subr.bf16.mxu0 0
          %781 = vmatpush2.bf16.msra.mxu0 0
          %782 = vmatprep.subr.bf16.mxu0 0
          %783 = vmatpush2.bf16.msra.mxu0 0
          %784 = vmatprep.subr.bf16.mxu0 0
          %785 = vmatpush2.bf16.msra.mxu0 0
          %786 = vmatprep.subr.bf16.mxu0 0
          %787 = vmatpush2.bf16.msra.mxu0 0
          %788 = vmatprep.subr.bf16.mxu0 0
          %789 = vmatpush2.bf16.msra.mxu0 0
          %790 = vmatprep.subr.bf16.mxu0 0
          %791 = vmatpush2.bf16.msra.mxu0 0
          %792 = vmatprep.subr.bf16.mxu0 0
          %793 = vmatpush2.bf16.msra.mxu0 0
          %794 = vmatprep.mubr.bf16.mxu0 0
          %795 = vmatmul.mubr.bf16.gmra.mxu0 %v697
          %v796 = vpop.f32.mrf.mxu0
          %v797 = vadd.f32 0.0, %v796
          %v798 = vpop.f32.mrf.mxu0
          %v799 = vpop.f32.mrf.mxu0
          %v800 = vpop.f32.mrf.mxu0
          %801 = vdwg.mxu0
          %s802 = smul.u32 %s696, 8
          %s803 = scalar_lea.vmem [#allocation3], %s802
          %804 = vst [vmem:[%s803] sm:$0xff] %v797
        $region86: #{_mlp_forward_impl.1} parent=39 // pred_fallthru
          _
        %p805 = scmp.eq.s32.totalorder %s24, 1
        // Predicated region
        $region87: #{_mlp_forward_impl.1} parent=39 // pred_check
          %p806 = pneg %p805
        $region88: #{_mlp_forward_impl.1} parent=39 // pred_check_branch
          %808 = sbr.rel (%p806) target = $region90
        $region89: #{_mlp_forward_impl.1} parent=39 // pred_region
          %s809 = ssub.s32 %s24, 1
          %p810 = scmp.lt.s32.totalorder %s809, 0
          %s811 = ssub.s32 0, %s809
          %s812 = scalar_select %p810, %s811, %s809
          %s813 = sand.u32 %s812, 1
          %s814 = ssub.s32 0, %s813
          %s815 = scalar_select %p810, %s814, %s813
          %s816 = smul.u32 %s815, 8
          %s817 = scalar_lea.vmem [#allocation3], %s816
          %v818 = vld [vmem:[%s817] sm:$0xff]
          %v819 = vrot.slane %v818, 4
          %v820 = vadd.f32 %v818, %v819
          %v821 = vrot.slane %v820, 2
          %v822 = vadd.f32 %v820, %v821
          %v823 = vrot.slane %v822, 1
          %v824 = vadd.f32 %v822, %v823
          %v825 = vmul.f32 %v824, 0.125
          %v826 = vsub.f32 %v818, %v825
          %v827 = vmul.f32 %v826, %v826
          %v828 = vrot.slane %v827, 4
          %v829 = vadd.f32 %v827, %v828
          %v830 = vrot.slane %v829, 2
          %v831 = vadd.f32 %v829, %v830
          %v832 = vrot.slane %v831, 1
          %v833 = vadd.f32 %v831, %v832
          %v834 = vmul.f32 %v833, 0.125
          %v835 = vadd.f32 %v834, 1e-05
          %v836 = vrsqrt.pop %v835
          %v837 = vmul.f32 %v826, %v836
          %v838 = vld [vmem:[%s345] sm:$0x1]
          %v840 = vlaneseq
          %v841 = vshrl.u32 %v840, 7
          %v842 = vsub.s32 0, %v841
          %v843 = vrot.slane %v838, %v842
          %v845 = vmul.f32 %v837, %v843
          %v846 = vld [vmem:[%s354] sm:$0x1]
          %v848 = vlaneseq
          %v849 = vshrl.u32 %v848, 7
          %v850 = vsub.s32 0, %v849
          %v851 = vrot.slane %v846, %v850
          %v853 = vadd.f32 %v845, %v851
          %v854 = vmax.f32 %v853, 0.0
          %v855 = vld [vmem:[#allocation2] sm:$0xff]
          %v856 = vpack.c.bf16 %v854, %v854
          %v857 = vld [vmem:[%s299] sm:$0xf]
          %v858 = vld [vmem:[%s299 + $0x4] sm:$0xf]
          %v859 = vld [vmem:[%s299 + $0x8] sm:$0xf]
          %v860 = vld [vmem:[%s299 + $0xc] sm:$0xf]
          %v861 = vld [vmem:[%s299 + $0x10] sm:$0xf]
          %v862 = vld [vmem:[%s299 + $0x14] sm:$0xf]
          %v863 = vld [vmem:[%s299 + $0x18] sm:$0xf]
          %v864 = vld [vmem:[%s299 + $0x1c] sm:$0xf]
          %v865 = vld [vmem:[%s299 + $0x20] sm:$0xf]
          %v866 = vld [vmem:[%s299 + $0x24] sm:$0xf]
          %v867 = vld [vmem:[%s299 + $0x28] sm:$0xf]
          %v868 = vld [vmem:[%s299 + $0x2c] sm:$0xf]
          %v869 = vld [vmem:[%s299 + $0x30] sm:$0xf]
          %v870 = vld [vmem:[%s299 + $0x34] sm:$0xf]
          %v871 = vld [vmem:[%s299 + $0x38] sm:$0xf]
          %v872 = vld [vmem:[%s299 + $0x3c] sm:$0xf]
          %v889 = vunpack.c.l.b16 %v857
          %v890 = vunpack.c.l.b16 %v858
          %v891 = vunpack.c.l.b16 %v859
          %v892 = vunpack.c.l.b16 %v860
          %v893 = vunpack.c.l.b16 %v861
          %v894 = vunpack.c.l.b16 %v862
          %v895 = vunpack.c.l.b16 %v863
          %v896 = vunpack.c.l.b16 %v864
          %v897 = vunpack.c.l.b16 %v865
          %v898 = vunpack.c.l.b16 %v866
          %v899 = vunpack.c.l.b16 %v867
          %v900 = vunpack.c.l.b16 %v868
          %v901 = vunpack.c.l.b16 %v869
          %v902 = vunpack.c.l.b16 %v870
          %v903 = vunpack.c.l.b16 %v871
          %v904 = vunpack.c.l.b16 %v872
          %v905 = vpack.c.b16 %v890, %v889
          %v906 = vpack.c.b16 %v892, %v891
          %v907 = vpack.c.b16 %v894, %v893
          %v908 = vpack.c.b16 %v896, %v895
          %v909 = vpack.c.b16 %v898, %v897
          %v910 = vpack.c.b16 %v900, %v899
          %v911 = vpack.c.b16 %v902, %v901
          %v912 = vpack.c.b16 %v904, %v903
          %921 = vmatprep.subr.bf16.mxu0 0
          %922 = vmatpush1.bf16.msra.mxu0 %v912
          %923 = vmatprep.subr.bf16.mxu0 0
          %924 = vmatpush1.bf16.msra.mxu0 %v911
          %925 = vmatprep.subr.bf16.mxu0 0
          %926 = vmatpush1.bf16.msra.mxu0 %v910
          %927 = vmatprep.subr.bf16.mxu0 0
          %928 = vmatpush1.bf16.msra.mxu0 %v909
          %929 = vmatprep.subr.bf16.mxu0 0
          %930 = vmatpush1.bf16.msra.mxu0 %v908
          %931 = vmatprep.subr.bf16.mxu0 0
          %932 = vmatpush1.bf16.msra.mxu0 %v907
          %933 = vmatprep.subr.bf16.mxu0 0
          %934 = vmatpush1.bf16.msra.mxu0 %v906
          %935 = vmatprep.subr.bf16.mxu0 0
          %936 = vmatpush1.bf16.msra.mxu0 %v905
          %937 = vmatprep.subr.bf16.mxu0 0
          %938 = vmatpush2.bf16.msra.mxu0 0
          %939 = vmatprep.subr.bf16.mxu0 0
          %940 = vmatpush2.bf16.msra.mxu0 0
          %941 = vmatprep.subr.bf16.mxu0 0
          %942 = vmatpush2.bf16.msra.mxu0 0
          %943 = vmatprep.subr.bf16.mxu0 0
          %944 = vmatpush2.bf16.msra.mxu0 0
          %945 = vmatprep.subr.bf16.mxu0 0
          %946 = vmatpush2.bf16.msra.mxu0 0
          %947 = vmatprep.subr.bf16.mxu0 0
          %948 = vmatpush2.bf16.msra.mxu0 0
          %949 = vmatprep.subr.bf16.mxu0 0
          %950 = vmatpush2.bf16.msra.mxu0 0
          %951 = vmatprep.subr.bf16.mxu0 0
          %952 = vmatpush2.bf16.msra.mxu0 0
          %953 = vmatprep.mubr.bf16.mxu0 0
          %954 = vmatmul.mubr.bf16.gmra.mxu0 %v856
          %v955 = vpop.f32.mrf.mxu0
          %v956 = vadd.f32 0.0, %v955
          %v957 = vpop.f32.mrf.mxu0
          %v958 = vpop.f32.mrf.mxu0
          %v959 = vpop.f32.mrf.mxu0
          %960 = vdwg.mxu0
          %v961 = vadd.f32 %v855, %v956
          %962 = vst [vmem:[#allocation2] sm:$0xff] %v961
          %v963 = vld [vmem:[#allocation2] sm:$0xff]
          %964 = vst [vmem:[#allocation11] sm:$0xff] %v963
        $region90: #{_mlp_forward_impl.1} parent=39 // pred_fallthru
          _
        // Predicated region
        $region91: #{_mlp_forward_impl.1} parent=39 // pred_check
          %p965 = pneg %p184
        $region92: #{_mlp_forward_impl.1} parent=39 // pred_check_branch
          %967 = sbr.rel (%p965) target = $region94
        $region93: #{_mlp_forward_impl.1} parent=39 // pred_region
          %s969 = ssub.s32 128, 128
          %970 = vsyncadd [#allocation8], %s969
          %s972 = sshll.u32 [#allocation11], 4
          %s973 = int_to_ptr.vmem [resolvable:$true] %s972
          %975 = dma.vmem_to_hbm [thread:$0]  %s973, 128, %s6, [#allocation8]
        $region94: #{_mlp_forward_impl.1} parent=39 // pred_fallthru
          _
        // Predicated region
        $region95: #{_mlp_forward_impl.1} parent=39 // pred_check
          %p976 = pneg %p184
        $region96: #{_mlp_forward_impl.1} parent=39 // pred_check_branch
          %978 = sbr.rel (%p976) target = $region98
        $region97: #{_mlp_forward_impl.1} parent=39 // pred_region
          %979 = dma.done [#allocation8], 128
        $region98: #{_mlp_forward_impl.1} parent=39 // pred_fallthru
          _
      $region40: #{_mlp_forward_impl.1} parent=5 // pred_fallthru
        _
      %p980 = scmp.le.s32.totalorder 2, %s19
      // Predicated region
      $region99: #{_mlp_forward_impl.1} parent=5 // pred_check
        %p981 = pneg %p980
      $region100: #{_mlp_forward_impl.1} parent=5 // pred_check_branch
        %983 = sbr.rel (%p981) target = $region102
      $region101: #{_mlp_forward_impl.1} parent=5 // pred_region
        %s984 = ssub.s32 %s19, 2
      $region102: #{_mlp_forward_impl.1} parent=5 // pred_fallthru
        _
    $region6: #{_mlp_forward_impl.1} parent=1 // loop_footer
      %s23 = sadd.s32 1, %s19
    $region7: #{_mlp_forward_impl.1} parent=1 // loop_footer_branch
      %18 = sbr.rel target = $region3
    $region8: #{_mlp_forward_impl.1} parent=1 // loop_exit
      _
    %985 = vsyncpa [#allocation7], 1
    %s986 = scalar_lea.sflag [#allocation7], 1
    %987 = vsyncpa %s986, 1
    %988 = vsyncpa [#allocation10], 1
    %s989 = scalar_lea.sflag [#allocation10], 1
    %990 = vsyncpa %s989, 1
    %991 = vsyncpa [#allocation8], 1
    %s992 = scalar_lea.sflag [#allocation8], 1
    %993 = vsyncpa %s992, 1
  %994 = vsyncmov [#allocation5]
  %s995 = vpop.sfrf %994
  %p996 = scmp.eq.s32.totalorder %s995, 0
  %p997 = pneg %p996
  %999 = shalt.err (%p997)

</llo_original>
